<compile_context>
chip_gen: v7x
topology: tpu7x:2x2x1
jax: 0.10.0
libtpu: 0.0.40
codegen_flags: <defaults>
</compile_context>

<pallas_src>
import jax
import jax.numpy as jnp
from jax.experimental import pallas as pl
from jax.experimental.pallas import tpu as pltpu


def _round_up(x, m):
    return ((x + m - 1) // m) * m


def _to_vector_kernel(x_ref, w1_ref, b1_ref, w2_ref, b2_ref, out_ref, hid_ref):
    # hidden = i2h(x) = x @ W1 + b1   -- MXU accumulates in f32, bias add in f32.
    x = x_ref[...]
    hidden = jnp.dot(x, w1_ref[...], preferred_element_type=jnp.float32)
    hidden = hidden + b1_ref[...]                      # (TB, H) + (1, H)
    hid_ref[...] = hidden.astype(hid_ref.dtype)

    # logits = h2o(hidden) = hidden @ W2 + b2.  Feed the MXU in the matmul
    # dtype (bf16 by default); bias add and softmax stay in f32.
    logits = jnp.dot(hidden.astype(w2_ref.dtype), w2_ref[...],
                     preferred_element_type=jnp.float32)
    logits = logits + b2_ref[...]                      # (TB, O) + (1, O)

    # Numerically stable LogSoftmax over dim=1 (lane axis), all in f32.
    m = jnp.max(logits, axis=-1, keepdims=True)
    shifted = logits - m
    lse = jnp.log(jnp.sum(jnp.exp(shifted), axis=-1, keepdims=True))
    out_ref[...] = (shifted - lse).astype(out_ref.dtype)


def to_vector_forward(x, w1, b1, w2, b2, *, batch_tile=512,
                      matmul_dtype=jnp.bfloat16):
    """x: (B, input_size); w1: (input_size, hidden); w2: (hidden, output_size).

    Weights are already transposed to (in_features, out_features) layout.
    Returns (log_softmax_output (B, output_size), hidden (B, hidden)),
    matching the PyTorch module's (output, hidden).
    """
    B, K = x.shape
    H = w1.shape[1]
    O = w2.shape[1]
    f32 = jnp.float32
    itemsize = jnp.dtype(matmul_dtype).itemsize

    # MXU operands in matmul_dtype; biases stay f32 (added post-accumulation).
    x_c = x.astype(matmul_dtype)
    w1_c = w1.astype(matmul_dtype)
    w2_c = w2.astype(matmul_dtype)
    b1_c = b1.astype(f32).reshape(1, H)
    b2_c = b2.astype(f32).reshape(1, O)

    # Batch tiling: big tiles amortize the ~0.35us/grid-step overhead; small
    # batches run as one 8-aligned tile (effectively gridless).
    if B >= batch_tile:
        TB = batch_tile
    else:
        TB = _round_up(B, 8)

    # VMEM estimate: resident weights/biases + double-buffered x/out/hid tiles.
    def _vmem_need(tb):
        w_bytes = (K * H + H * O) * itemsize + (H + O) * 4
        t_bytes = 2 * (tb * K * itemsize + tb * (H + O) * 4)
        return w_bytes + t_bytes

    # Keep comfortably inside v7x's 64 MiB physical VMEM (v5e/v6e have 128 MiB).
    while TB > 256 and _vmem_need(TB) > 48 * 1024 * 1024:
        TB //= 2

    B_pad = _round_up(B, TB)
    n_tiles = B_pad // TB
    if B_pad != B:
        # Only (cheap, sublane-axis) batch padding remains; no feature padding.
        x_c = jnp.zeros((B_pad, K), matmul_dtype).at[:B].set(x_c)

    vmem_limit = int(min(64 * 1024 * 1024,
                         max(32 * 1024 * 1024, 2 * _vmem_need(TB))))

    # Whole-array VMEM residency: one copy, no pipelining, no double buffer.
    resident = pl.BlockSpec(memory_space=pltpu.MemorySpace.VMEM)

    # TODO(synk): for a real word2vec vocab (output_size >> 10k), add an O-axis
    # grid dimension marked "arbitrary" that streams (H, TILE_O) slices of W2
    # with an online logsumexp (m/l scratch + pl.when init/finalize) instead of
    # keeping W2 fully VMEM-resident and materializing a whole (TB, O) logits row.
    out_p, hid_p = pl.pallas_call(
        _to_vector_kernel,
        out_shape=(
            jax.ShapeDtypeStruct((B_pad, O), f32),
            jax.ShapeDtypeStruct((B_pad, H), f32),
        ),
        grid=(n_tiles,),
        in_specs=[
            pl.BlockSpec((TB, K), lambda i: (i, 0)),   # x: batch-tiled
            resident,                                  # W1: VMEM-resident
            resident,                                  # b1
            resident,                                  # W2
            resident,                                  # b2
        ],
        out_specs=(
            pl.BlockSpec((TB, O), lambda i: (i, 0)),
            pl.BlockSpec((TB, H), lambda i: (i, 0)),
        ),
        compiler_params=pltpu.CompilerParams(
            dimension_semantics=("parallel",),
            vmem_limit_bytes=vmem_limit,
        ),
        cost_estimate=pl.CostEstimate(
            flops=2 * B_pad * (K * H + H * O),
            transcendentals=B_pad * O,
            bytes_accessed=(B_pad * K * itemsize
                            + (K * H + H * O) * itemsize + (H + O) * 4
                            + B_pad * (H + O) * 4),
        ),
    )(x_c, w1_c, b1_c, w2_c, b2_c)

    if B_pad != B:
        return out_p[:B], hid_p[:B]
    return out_p, hid_p


if __name__ == "__main__":
    # Small shapes consistent with the module: vocab (input==output) = 32,
    # hidden_size = 20 (as in the original script), batch = 8.
    batch = 8
    input_size = 32
    hidden_size = 20
    output_size = 32

    key = jax.random.PRNGKey(0)
    kx, k1, k2, k3, k4 = jax.random.split(key, 5)

    x = jax.random.normal(kx, (batch, input_size), dtype=jnp.float32)

    # Deterministic init mimicking nn.Linear's uniform(-1/sqrt(in), 1/sqrt(in)).
    lim1 = 1.0 / jnp.sqrt(jnp.float32(input_size))
    lim2 = 1.0 / jnp.sqrt(jnp.float32(hidden_size))
    # Stored already transposed to (in_features, out_features) for the kernel.
    w1 = jax.random.uniform(k1, (input_size, hidden_size), jnp.float32, -lim1, lim1)
    b1 = jax.random.uniform(k2, (hidden_size,), jnp.float32, -lim1, lim1)
    w2 = jax.random.uniform(k3, (hidden_size, output_size), jnp.float32, -lim2, lim2)
    b2 = jax.random.uniform(k4, (output_size,), jnp.float32, -lim2, lim2)

    # Pure-JAX f32 reference.
    hidden_ref = x @ w1 + b1
    out_ref = jax.nn.log_softmax(hidden_ref @ w2 + b2, axis=1)

    # Exact-f32 MXU path: tight tolerance vs the reference.
    out32, hid32 = to_vector_forward(x, w1, b1, w2, b2, matmul_dtype=jnp.float32)
    jax.block_until_ready((out32, hid32))
    assert jnp.allclose(hid32, hidden_ref, atol=5e-4), "f32 hidden mismatch"
    assert jnp.allclose(out32, out_ref, atol=5e-4), "f32 log_softmax mismatch"

    # Default bf16-fed MXU path (v6e/v7x fast path): looser tolerance.
    out_bf, hid_bf = to_vector_forward(x, w1, b1, w2, b2)
    jax.block_until_ready((out_bf, hid_bf))
    assert jnp.allclose(hid_bf, hidden_ref, atol=3e-2), "bf16 hidden mismatch"
    assert jnp.allclose(out_bf, out_ref, atol=3e-2), "bf16 log_softmax mismatch"

    print("KERNEL_OK")
</pallas_src>

<mosaic_0001>
module attributes {stable_mosaic.version = 11 : i64} {
  func.func @_to_vector_kernel(%arg0: i32, %arg1: memref<8x32xf32, #tpu.memory_space<vmem>>, %arg2: memref<32x20xf32, #tpu.memory_space<vmem>>, %arg3: memref<1x20xf32, #tpu.memory_space<vmem>>, %arg4: memref<20x32xf32, #tpu.memory_space<vmem>>, %arg5: memref<1x32xf32, #tpu.memory_space<vmem>>, %arg6: memref<8x32xf32, #tpu.memory_space<vmem>>, %arg7: memref<8x20xf32, #tpu.memory_space<vmem>>) attributes {dimension_semantics = [#tpu.dimension_semantics<parallel>], iteration_bounds = array<i64: 1>, scalar_prefetch = 0 : i64, scratch_operands = 0 : i64, tpu.core_type = #tpu.core_type<tc>, window_params = [{transform_indices = @transform_0, window_bounds = array<i64: 8, 32>}, {pipeline_mode = #tpu.pipeline_mode<synchronous>, transform_indices = @transform_1, window_bounds = array<i64: 32, 20>}, {pipeline_mode = #tpu.pipeline_mode<synchronous>, transform_indices = @transform_2, window_bounds = array<i64: 1, 20>}, {pipeline_mode = #tpu.pipeline_mode<synchronous>, transform_indices = @transform_3, window_bounds = array<i64: 20, 32>}, {pipeline_mode = #tpu.pipeline_mode<synchronous>, transform_indices = @transform_4, window_bounds = array<i64: 1, 32>}, {transform_indices = @transform_5, window_bounds = array<i64: 8, 32>}, {transform_indices = @transform_6, window_bounds = array<i64: 8, 20>}]} {
    %c0 = arith.constant 0 : index
    %c0_0 = arith.constant 0 : index
    %0 = vector.load %arg1[%c0, %c0_0] : memref<8x32xf32, #tpu.memory_space<vmem>>, vector<8x32xf32>
    %c0_1 = arith.constant 0 : index
    %c0_2 = arith.constant 0 : index
    %1 = vector.load %arg2[%c0_1, %c0_2] : memref<32x20xf32, #tpu.memory_space<vmem>>, vector<32x20xf32>
    %cst = arith.constant dense<0.000000e+00> : vector<8x20xf32>
    %2 = tpu.matmul %0, %1, %cst {dimension_numbers = #tpu.dot_dimension_numbers<[1], [0], [0], [1], [0, 0, 1, 1], [], []>} : vector<8x32xf32>, vector<32x20xf32>, vector<8x20xf32> -> vector<8x20xf32>
    %c0_3 = arith.constant 0 : index
    %c0_4 = arith.constant 0 : index
    %3 = vector.load %arg3[%c0_3, %c0_4] : memref<1x20xf32, #tpu.memory_space<vmem>>, vector<1x20xf32>
    %4 = vector.broadcast %3 : vector<1x20xf32> to vector<8x20xf32>
    %5 = arith.addf %2, %4 : vector<8x20xf32>
    %c0_5 = arith.constant 0 : index
    %c0_6 = arith.constant 0 : index
    %6 = vector.load %arg7[%c0_5, %c0_6] : memref<8x20xf32, #tpu.memory_space<vmem>>, vector<8x20xf32>
    tpu.vector_store %arg7[%c0_5, %c0_6], %5 {strides = array<i32>} : memref<8x20xf32, #tpu.memory_space<vmem>>, vector<8x20xf32>,
    %c0_7 = arith.constant 0 : index
    %c0_8 = arith.constant 0 : index
    %7 = vector.load %arg4[%c0_7, %c0_8] : memref<20x32xf32, #tpu.memory_space<vmem>>, vector<20x32xf32>
    %cst_9 = arith.constant dense<0.000000e+00> : vector<8x32xf32>
    %8 = tpu.matmul %5, %7, %cst_9 {dimension_numbers = #tpu.dot_dimension_numbers<[1], [0], [0], [1], [0, 0, 1, 1], [], []>} : vector<8x20xf32>, vector<20x32xf32>, vector<8x32xf32> -> vector<8x32xf32>
    %c0_10 = arith.constant 0 : index
    %c0_11 = arith.constant 0 : index
    %9 = vector.load %arg5[%c0_10, %c0_11] : memref<1x32xf32, #tpu.memory_space<vmem>>, vector<1x32xf32>
    %10 = vector.broadcast %9 : vector<1x32xf32> to vector<8x32xf32>
    %11 = arith.addf %8, %10 : vector<8x32xf32>
    %cst_12 = arith.constant dense<0xFF800000> : vector<8xf32>
    %12 = vector.multi_reduction <maximumf>, %11, %cst_12 [1] : vector<8x32xf32> to vector<8xf32>
    %13 = vector.shape_cast %12 : vector<8xf32> to vector<8x1xf32>
    %14 = vector.broadcast %13 : vector<8x1xf32> to vector<8x32xf32>
    %15 = arith.subf %11, %14 : vector<8x32xf32>
    %16 = math.exp %15 : vector<8x32xf32>
    %cst_13 = arith.constant dense<0.000000e+00> : vector<8xf32>
    %17 = vector.multi_reduction <add>, %16, %cst_13 [1] : vector<8x32xf32> to vector<8xf32>
    %18 = vector.shape_cast %17 : vector<8xf32> to vector<8x1xf32>
    %19 = math.log %18 : vector<8x1xf32>
    %20 = vector.broadcast %19 : vector<8x1xf32> to vector<8x32xf32>
    %21 = arith.subf %15, %20 : vector<8x32xf32>
    %c0_14 = arith.constant 0 : index
    %c0_15 = arith.constant 0 : index
    %22 = vector.load %arg6[%c0_14, %c0_15] : memref<8x32xf32, #tpu.memory_space<vmem>>, vector<8x32xf32>
    tpu.vector_store %arg6[%c0_14, %c0_15], %21 {strides = array<i32>} : memref<8x32xf32, #tpu.memory_space<vmem>>, vector<8x32xf32>,
    return
  }
  func.func @transform_0(%arg0: i32) -> (i32, i32) {
    %c0_i32 = arith.constant 0 : i32
    %c0_i32_0 = arith.constant 0 : i32
    return %arg0, %c0_i32 : i32, i32
  }
  func.func @transform_1(%arg0: i32) -> (i32, i32) {
    %c0_i32 = arith.constant 0 : i32
    %c0_i32_0 = arith.constant 0 : i32
    %c0_i32_1 = arith.constant 0 : i32
    return %c0_i32, %c0_i32_0 : i32, i32
  }
  func.func @transform_2(%arg0: i32) -> (i32, i32) {
    %c0_i32 = arith.constant 0 : i32
    %c0_i32_0 = arith.constant 0 : i32
    %c0_i32_1 = arith.constant 0 : i32
    return %c0_i32, %c0_i32_0 : i32, i32
  }
  func.func @transform_3(%arg0: i32) -> (i32, i32) {
    %c0_i32 = arith.constant 0 : i32
    %c0_i32_0 = arith.constant 0 : i32
    %c0_i32_1 = arith.constant 0 : i32
    return %c0_i32, %c0_i32_0 : i32, i32
  }
  func.func @transform_4(%arg0: i32) -> (i32, i32) {
    %c0_i32 = arith.constant 0 : i32
    %c0_i32_0 = arith.constant 0 : i32
    %c0_i32_1 = arith.constant 0 : i32
    return %c0_i32, %c0_i32_0 : i32, i32
  }
  func.func @transform_5(%arg0: i32) -> (i32, i32) {
    %c0_i32 = arith.constant 0 : i32
    %c0_i32_0 = arith.constant 0 : i32
    return %arg0, %c0_i32 : i32, i32
  }
  func.func @transform_6(%arg0: i32) -> (i32, i32) {
    %c0_i32 = arith.constant 0 : i32
    %c0_i32_0 = arith.constant 0 : i32
    return %arg0, %c0_i32 : i32, i32
  }
}

</mosaic_0001>

<llo_original>
// kernel: tpu_custom_call.1
$region0: #{tpu_custom_call.1}
  #allocation0 [shape = 'u32[]', space=smem, size = 0x4, offset = 0x4, fixed_abs, tag = 'smem constant byte address 0x4 - core index']
  #allocation1 [shape = 'u32[144,128]{1,0:T(1,128)}', space=vmem, size = 0x12000, scoped, tag = 'internal scratch']
  %s0 = inlined_call_operand.vmem [shape: f32[8,32], index: 0, kind: input, shape index: {}]
  %s1 = inlined_call_operand.vmem [shape: f32[32,20], index: 1, kind: input, shape index: {}]
  %s2 = inlined_call_operand.vmem [shape: f32[1,20], index: 2, kind: input, shape index: {}]
  %s3 = inlined_call_operand.vmem [shape: f32[20,32], index: 3, kind: input, shape index: {}]
  %s4 = inlined_call_operand.vmem [shape: f32[1,32], index: 4, kind: input, shape index: {}]
  %s5 = inlined_call_operand.hbm [shape: f32[8,32], index: 5, kind: output, shape index: {0}]
  %s6 = inlined_call_operand.hbm [shape: f32[8,20], index: 6, kind: output, shape index: {1}]
  %7 = xla_tuple %s5, %s6
  %s8 = sld [smem:[#allocation0]]
  $region38: #{tpu_custom_call.1} parent=0
    _
  %s10 = ssub.s32 1, %s8
  %s11 = scalar_select 0, %s10, %s8
  $region1: #{tpu_custom_call.1} parent=0
    #allocation2 [shape = 'u8[4096]{0}', space=vmem, size = 0x1000, scoped, tag = 'output window, operand 0, single buffered']
    #allocation3 [shape = 's32[1]{0}', space=sflag, size = 0x4, scoped, tag = 'scoped memory for tpu_custom_call.1']
    #allocation4 [shape = 'u8[4096]{0}', space=vmem, size = 0x1000, scoped, tag = 'output window, operand 1, single buffered']
    #allocation5 [shape = 's32[1]{0}', space=sflag, size = 0x4, scoped, tag = 'scoped memory for tpu_custom_call.1']
    %12 = vsyncpa [#allocation3], 0
    %13 = vsyncpa [#allocation5], 0
    // Predicated region
    $region2: #{tpu_custom_call.1} parent=1 // pred_check
      _
    $region3: #{tpu_custom_call.1} parent=1 // pred_check_branch
      %15 = sbr.rel (0) target = $region5
    $region4: #{tpu_custom_call.1} parent=1 // pred_region
      _
    $region5: #{tpu_custom_call.1} parent=1 // pred_fallthru
      _
    // Predicated region
    $region6: #{tpu_custom_call.1} parent=1 // pred_check
      _
    $region7: #{tpu_custom_call.1} parent=1 // pred_check_branch
      %17 = sbr.rel (0) target = $region9
    $region8: #{tpu_custom_call.1} parent=1 // pred_region
      _
    $region9: #{tpu_custom_call.1} parent=1 // pred_fallthru
      _
    // Predicated region
    $region10: #{tpu_custom_call.1} parent=1 // pred_check
      _
    $region11: #{tpu_custom_call.1} parent=1 // pred_check_branch
      %19 = sbr.rel (0) target = $region13
    $region12: #{tpu_custom_call.1} parent=1 // pred_region
      _
    $region13: #{tpu_custom_call.1} parent=1 // pred_fallthru
      _
    // Predicated region
    $region14: #{tpu_custom_call.1} parent=1 // pred_check
      _
    $region15: #{tpu_custom_call.1} parent=1 // pred_check_branch
      %21 = sbr.rel (0) target = $region17
    $region16: #{tpu_custom_call.1} parent=1 // pred_region
      _
    $region17: #{tpu_custom_call.1} parent=1 // pred_fallthru
      _
    // Predicated region
    $region18: #{tpu_custom_call.1} parent=1 // pred_check
      _
    $region19: #{tpu_custom_call.1} parent=1 // pred_check_branch
      %23 = sbr.rel (0) target = $region21
    $region20: #{tpu_custom_call.1} parent=1 // pred_region
      _
    $region21: #{tpu_custom_call.1} parent=1 // pred_fallthru
      _
    %v24 = vld [vmem:[%s0] sm:$0xff]
    %v25 = vld [vmem:[%s1] sm:$0xff]
    %v26 = vld [vmem:[%s1 + $0x8] sm:$0xff]
    %v27 = vld [vmem:[%s1 + $0x10] sm:$0xff]
    %v28 = vld [vmem:[%s1 + $0x18] sm:$0xff]
    %v29 = vld [vmem:[%s2] sm:$0x1]
    %v31 = vlaneseq
    %v32 = vshrl.u32 %v31, 7
    %v33 = vsub.s32 0, %v32
    %v34 = vrot.slane %v29, %v33
    %vm36 = vcmask 261120
    %v38 = vsel %vm36, %v24, 0
    %40 = vmatprep.subr.mxu0 0.0
    %41 = vmatpush1.msra.mxu0 %v25
    %42 = vmatprep.subr.mxu0 0.0
    %43 = vmatpush1.msra.mxu0 %v26
    %44 = vmatprep.subr.mxu0 0.0
    %45 = vmatpush1.msra.mxu0 %v27
    %46 = vmatprep.subr.mxu0 0.0
    %47 = vmatpush1.msra.mxu0 %v28
    %48 = vmatprep.subr.mxu0 0.0
    %49 = vmatpush1.msra.mxu0 0.0
    %50 = vmatprep.subr.mxu0 0.0
    %51 = vmatpush1.msra.mxu0 0.0
    %52 = vmatprep.subr.mxu0 0.0
    %53 = vmatpush1.msra.mxu0 0.0
    %54 = vmatprep.subr.mxu0 0.0
    %55 = vmatpush1.msra.mxu0 0.0
    %56 = vmatprep.subr.mxu0 0.0
    %57 = vmatpush1.msra.mxu0 0.0
    %58 = vmatprep.subr.mxu0 0.0
    %59 = vmatpush1.msra.mxu0 0.0
    %60 = vmatprep.subr.mxu0 0.0
    %61 = vmatpush1.msra.mxu0 0.0
    %62 = vmatprep.subr.mxu0 0.0
    %63 = vmatpush1.msra.mxu0 0.0
    %64 = vmatprep.subr.mxu0 0.0
    %65 = vmatpush1.msra.mxu0 0.0
    %66 = vmatprep.subr.mxu0 0.0
    %67 = vmatpush1.msra.mxu0 0.0
    %68 = vmatprep.subr.mxu0 0.0
    %69 = vmatpush1.msra.mxu0 0.0
    %70 = vmatprep.subr.mxu0 0.0
    %71 = vmatpush1.msra.mxu0 0.0
    %72 = vmatprep.subr.mxu0 0.0
    %73 = vmatpush1.msra.mxu0 0.0
    %74 = vmatprep.subr.mxu0 0.0
    %75 = vmatpush1.msra.mxu0 0.0
    %76 = vmatprep.subr.mxu0 0.0
    %77 = vmatpush1.msra.mxu0 0.0
    %78 = vmatprep.subr.mxu0 0.0
    %79 = vmatpush1.msra.mxu0 0.0
    %80 = vmatprep.subr.mxu0 0.0
    %81 = vmatpush1.msra.mxu0 0.0
    %82 = vmatprep.subr.mxu0 0.0
    %83 = vmatpush1.msra.mxu0 0.0
    %84 = vmatprep.subr.mxu0 0.0
    %85 = vmatpush1.msra.mxu0 0.0
    %86 = vmatprep.subr.mxu0 0.0
    %87 = vmatpush1.msra.mxu0 0.0
    %88 = vmatprep.subr.mxu0 0.0
    %89 = vmatpush1.msra.mxu0 0.0
    %90 = vmatprep.subr.mxu0 0.0
    %91 = vmatpush1.msra.mxu0 0.0
    %92 = vmatprep.subr.mxu0 0.0
    %93 = vmatpush1.msra.mxu0 0.0
    %94 = vmatprep.subr.mxu0 0.0
    %95 = vmatpush1.msra.mxu0 0.0
    %96 = vmatprep.subr.mxu0 0.0
    %97 = vmatpush1.msra.mxu0 0.0
    %98 = vmatprep.subr.mxu0 0.0
    %99 = vmatpush1.msra.mxu0 0.0
    %100 = vmatprep.subr.mxu0 0.0
    %101 = vmatpush1.msra.mxu0 0.0
    %102 = vmatprep.subr.mxu0 0.0
    %103 = vmatpush1.msra.mxu0 0.0
    %104 = vmatprep.mubr.f32.mxu0 0.0
    %105 = vmatmul.mubr.f32.gmra.mrb[0].mxu0 %v38
    %v106 = vpop.f32.mrb[0].mxu0
    %v107 = vadd.f32 %v34, %v106
    %v108 = vpop.f32.mrb[0].mxu0
    %109 = vdwg.mxu0
    %vm110 = vcmask 162816
    %111 = vst.msk [vmem:[#allocation4] sm:$0xff] %vm110, %v107
    %v112 = vld [vmem:[%s3] sm:$0xff]
    %v113 = vld [vmem:[%s3 + $0x8] sm:$0xff]
    %v114 = vld [vmem:[%s3 + $0x10] sm:$0xf]
    %v115 = vld [vmem:[%s4] sm:$0x1]
    %v117 = vlaneseq
    %v118 = vshrl.u32 %v117, 7
    %v119 = vsub.s32 0, %v118
    %v120 = vrot.slane %v115, %v119
    %v123 = vsel %vm110, %v107, 0
    %vm125 = vcmask 1043456
    %v127 = vsel %vm125, %v114, 0
    %129 = vmatprep.subr.mxu0 0.0
    %130 = vmatpush1.msra.mxu0 %v112
    %131 = vmatprep.subr.mxu0 0.0
    %132 = vmatpush1.msra.mxu0 %v113
    %133 = vmatprep.subr.mxu0 0.0
    %134 = vmatpush1.msra.mxu0 %v127
    %135 = vmatprep.subr.mxu0 0.0
    %136 = vmatpush1.msra.mxu0 0.0
    %137 = vmatprep.subr.mxu0 0.0
    %138 = vmatpush1.msra.mxu0 0.0
    %139 = vmatprep.subr.mxu0 0.0
    %140 = vmatpush1.msra.mxu0 0.0
    %141 = vmatprep.subr.mxu0 0.0
    %142 = vmatpush1.msra.mxu0 0.0
    %143 = vmatprep.subr.mxu0 0.0
    %144 = vmatpush1.msra.mxu0 0.0
    %145 = vmatprep.subr.mxu0 0.0
    %146 = vmatpush1.msra.mxu0 0.0
    %147 = vmatprep.subr.mxu0 0.0
    %148 = vmatpush1.msra.mxu0 0.0
    %149 = vmatprep.subr.mxu0 0.0
    %150 = vmatpush1.msra.mxu0 0.0
    %151 = vmatprep.subr.mxu0 0.0
    %152 = vmatpush1.msra.mxu0 0.0
    %153 = vmatprep.subr.mxu0 0.0
    %154 = vmatpush1.msra.mxu0 0.0
    %155 = vmatprep.subr.mxu0 0.0
    %156 = vmatpush1.msra.mxu0 0.0
    %157 = vmatprep.subr.mxu0 0.0
    %158 = vmatpush1.msra.mxu0 0.0
    %159 = vmatprep.subr.mxu0 0.0
    %160 = vmatpush1.msra.mxu0 0.0
    %161 = vmatprep.subr.mxu0 0.0
    %162 = vmatpush1.msra.mxu0 0.0
    %163 = vmatprep.subr.mxu0 0.0
    %164 = vmatpush1.msra.mxu0 0.0
    %165 = vmatprep.subr.mxu0 0.0
    %166 = vmatpush1.msra.mxu0 0.0
    %167 = vmatprep.subr.mxu0 0.0
    %168 = vmatpush1.msra.mxu0 0.0
    %169 = vmatprep.subr.mxu0 0.0
    %170 = vmatpush1.msra.mxu0 0.0
    %171 = vmatprep.subr.mxu0 0.0
    %172 = vmatpush1.msra.mxu0 0.0
    %173 = vmatprep.subr.mxu0 0.0
    %174 = vmatpush1.msra.mxu0 0.0
    %175 = vmatprep.subr.mxu0 0.0
    %176 = vmatpush1.msra.mxu0 0.0
    %177 = vmatprep.subr.mxu0 0.0
    %178 = vmatpush1.msra.mxu0 0.0
    %179 = vmatprep.subr.mxu0 0.0
    %180 = vmatpush1.msra.mxu0 0.0
    %181 = vmatprep.subr.mxu0 0.0
    %182 = vmatpush1.msra.mxu0 0.0
    %183 = vmatprep.subr.mxu0 0.0
    %184 = vmatpush1.msra.mxu0 0.0
    %185 = vmatprep.subr.mxu0 0.0
    %186 = vmatpush1.msra.mxu0 0.0
    %187 = vmatprep.subr.mxu0 0.0
    %188 = vmatpush1.msra.mxu0 0.0
    %189 = vmatprep.subr.mxu0 0.0
    %190 = vmatpush1.msra.mxu0 0.0
    %191 = vmatprep.subr.mxu0 0.0
    %192 = vmatpush1.msra.mxu0 0.0
    %193 = vmatprep.mubr.f32.mxu0 0.0
    %194 = vmatmul.mubr.f32.gmra.mrb[0].mxu0 %v123
    %v195 = vpop.f32.mrb[0].mxu0
    %v196 = vadd.f32 %v120, %v195
    %v197 = vpop.f32.mrb[0].mxu0
    %198 = vdwg.mxu0
    %v199 = vsel %vm36, %v196, -inf
    %200 = vmax.xlane.f32.xlu0 %v199
    %v201 = vpop.xlane.xlu0 %200
    %v202 = vsub.f32 %v196, %v201
    %v203 = vmul.f32 %v202, 1.442695
    %v204 = vpow.pop %v203
    %v205 = vsel %vm36, %v204, 0.0
    %206 = vadd.xlane.f32.xlu0 %v205
    %v207 = vpop.xlane.xlu0 %206
    %v208 = vlog2.pop %v207
    %v209 = vmul.f32 %v208, 0.6931472
    %v210 = vsub.f32 %v202, %v209
    %211 = vst.msk [vmem:[#allocation2] sm:$0xff] %vm36, %v210
    // Predicated region
    $region22: #{tpu_custom_call.1} parent=1 // pred_check
      _
    $region23: #{tpu_custom_call.1} parent=1 // pred_check_branch
      %213 = sbr.rel (0) target = $region25
    $region24: #{tpu_custom_call.1} parent=1 // pred_region
      %s215 = ssub.s32 128, 128
      %216 = vsyncadd [#allocation3], %s215
      %s218 = sshll.u32 [#allocation2], 4
      %s219 = int_to_ptr.vmem [resolvable:$true] %s218
      %221 = dma.vmem_to_hbm [thread:$0]  %s219, 128, %s5, [#allocation3]
    $region25: #{tpu_custom_call.1} parent=1 // pred_fallthru
      _
    // Predicated region
    $region26: #{tpu_custom_call.1} parent=1 // pred_check
      _
    $region27: #{tpu_custom_call.1} parent=1 // pred_check_branch
      %223 = sbr.rel (0) target = $region29
    $region28: #{tpu_custom_call.1} parent=1 // pred_region
      %s225 = ssub.s32 128, 128
      %226 = vsyncadd [#allocation5], %s225
      %s228 = sshll.u32 [#allocation4], 4
      %s229 = int_to_ptr.vmem [resolvable:$true] %s228
      %231 = dma.vmem_to_hbm [thread:$0]  %s229, 128, %s6, [#allocation5]
    $region29: #{tpu_custom_call.1} parent=1 // pred_fallthru
      _
    // Predicated region
    $region30: #{tpu_custom_call.1} parent=1 // pred_check
      _
    $region31: #{tpu_custom_call.1} parent=1 // pred_check_branch
      %233 = sbr.rel (0) target = $region33
    $region32: #{tpu_custom_call.1} parent=1 // pred_region
      %234 = dma.done [#allocation3], 128
    $region33: #{tpu_custom_call.1} parent=1 // pred_fallthru
      _
    // Predicated region
    $region34: #{tpu_custom_call.1} parent=1 // pred_check
      _
    $region35: #{tpu_custom_call.1} parent=1 // pred_check_branch
      %236 = sbr.rel (0) target = $region37
    $region36: #{tpu_custom_call.1} parent=1 // pred_region
      %237 = dma.done [#allocation5], 128
    $region37: #{tpu_custom_call.1} parent=1 // pred_fallthru
      _
    %238 = vsyncpa [#allocation3], 1
    %239 = vsyncpa [#allocation5], 1

</llo_original>
